<compile_context>
chip_gen: v7x
topology: tpu7x:2x2x1
jax: 0.10.0
libtpu: 0.0.40
codegen_flags: <defaults>
</compile_context>

<pallas_src>
import jax
import jax.numpy as jnp
from jax.experimental import pallas as pl
from jax.experimental.pallas import tpu as pltpu


_LANES = 128
_SUBLANES = 8
_MAX_ROW_TILE = 2048          # 2 inputs x 2 bufs x 2048 x 128 x 4B = 4 MiB (f32)
_SMALL_N_ELEMENTS = 1 << 18   # below ~1 MiB (f32) the pallas_call overhead dominates


def _mse_partial_kernel(w_ref, x_ref, t_ref, out_ref, acc_ref):
    """Accumulate per-lane partial sums of (x*w - t)^2 for one row tile."""
    i = pl.program_id(1)                       # reduction axis ("arbitrary")

    @pl.when(i == 0)
    def _():
        acc_ref[...] = jnp.zeros_like(acc_ref)

    w = w_ref[0, 0]                            # scalar weight from SMEM
    d = x_ref[...].astype(jnp.float32) * w - t_ref[...].astype(jnp.float32)
    sq = d * d
    # Fold the (row_tile, 128) tile into vreg-shaped (8, 128) partial sums.
    # The reshape does not cross (8, 128) tile boundaries and the axis-0 sum
    # lowers to plain VPU adds, so no cross-lane (XLU) reduce in the hot loop.
    acc_ref[...] += jnp.sum(sq.reshape(-1, _SUBLANES, _LANES), axis=0)

    @pl.when(i == pl.num_programs(1) - 1)
    def _():
        out_ref[...] = acc_ref[...]            # single lane-dense (8,128) store


def content_loss_forward(x, target_scaled, weight, *, force_kernel=False):
    """Returns (output, loss) matching ContentLoss.forward.

    output == x (identity pass-through, plain JAX).
    loss   == mean((x * weight - target_scaled)**2), computed in Pallas for
    feature-map-sized inputs; tiny inputs fall back to a fused XLA reduction.
    """
    n_total = x.size
    w32 = jnp.asarray(weight, dtype=jnp.float32)

    if n_total < _SMALL_N_ELEMENTS and not force_kernel:
        d = x.astype(jnp.float32) * w32 - target_scaled.astype(jnp.float32)
        return x, jnp.mean(d * d)

    # ---- Pallas path: flatten to a (rows, 128) lane-major slab -------------
    rows_needed = -(-n_total // _LANES)
    # Leading "parallel" split of 2: v7x runs one half per TensorCore; on
    # single-TC v5e/v6e it is just two sequential passes (no harm).
    num_splits = 2 if rows_needed >= 2 * _SUBLANES else 1
    per_split = -(-rows_needed // num_splits)
    row_tile = min(_MAX_ROW_TILE, -(-per_split // _SUBLANES) * _SUBLANES)
    tiles_per_split = -(-per_split // row_tile)
    rows_padded = num_splits * tiles_per_split * row_tile
    padded_total = rows_padded * _LANES

    x_flat = x.reshape(-1)                     # native dtype; cast inside kernel
    t_flat = target_scaled.reshape(-1)
    if padded_total != n_total:
        pad = padded_total - n_total
        x_flat = jnp.pad(x_flat, (0, pad))     # zero-pad tail: contributes 0
        t_flat = jnp.pad(t_flat, (0, pad))
    x2 = x_flat.reshape(rows_padded, _LANES)
    t2 = t_flat.reshape(rows_padded, _LANES)
    w_arr = w32.reshape(1, 1)

    partials = pl.pallas_call(
        _mse_partial_kernel,
        out_shape=jax.ShapeDtypeStruct((num_splits * _SUBLANES, _LANES),
                                       jnp.float32),
        grid_spec=pltpu.PrefetchScalarGridSpec(
            num_scalar_prefetch=0,
            grid=(num_splits, tiles_per_split),
            in_specs=[
                pl.BlockSpec(memory_space=pltpu.SMEM),             # weight scalar
                pl.BlockSpec((row_tile, _LANES),
                             lambda p, i: (p * tiles_per_split + i, 0)),
                pl.BlockSpec((row_tile, _LANES),
                             lambda p, i: (p * tiles_per_split + i, 0)),
            ],
            out_specs=pl.BlockSpec((_SUBLANES, _LANES), lambda p, i: (p, 0)),
            scratch_shapes=[pltpu.VMEM((_SUBLANES, _LANES), jnp.float32)],
        ),
        compiler_params=pltpu.CompilerParams(
            dimension_semantics=("parallel", "arbitrary")),
    )(w_arr, x2, t2)

    loss = jnp.sum(partials) / jnp.float32(n_total)
    return x, loss


class ContentLoss:
    """Thin JAX wrapper mirroring the PyTorch module interface."""

    def __init__(self, target, weight):
        self.weight = weight
        self.target = jax.lax.stop_gradient(target) * weight  # detach * weight
        self.loss = None
        self.output = None

    def forward(self, inp):
        self.output, self.loss = content_loss_forward(inp, self.target, self.weight)
        return self.output

    # TODO(synk): backward() (autograd .backward on the stored loss) has no
    # direct Pallas equivalent; use jax.grad over content_loss_forward instead.


if __name__ == "__main__":
    key = jax.random.PRNGKey(0)
    k1, k2, k3, k4 = jax.random.split(key, 4)

    # Small NCHW feature maps consistent with the module.
    x = jax.random.normal(k1, (2, 4, 16, 16), dtype=jnp.float32)
    target = jax.random.normal(k2, (2, 4, 16, 16), dtype=jnp.float32)
    weight = 0.75

    # Module path (auto-dispatch; this tiny input uses the XLA fallback).
    module = ContentLoss(target, weight)
    out = module.forward(x)
    ref_loss = jnp.mean((x * weight - module.target) ** 2)
    jax.block_until_ready((out, module.loss))
    assert jnp.allclose(module.loss, ref_loss, rtol=1e-5, atol=1e-6), (
        module.loss, ref_loss)
    assert jnp.array_equal(out, x)

    # Explicitly exercise the Pallas kernel path on the same small input.
    out_k, loss_k = content_loss_forward(x, module.target, weight,
                                         force_kernel=True)
    jax.block_until_ready((out_k, loss_k))
    assert jnp.allclose(loss_k, ref_loss, rtol=1e-5, atol=1e-6), (loss_k, ref_loss)
    assert jnp.array_equal(out_k, x)

    # Exercise the zero-padded tail path (count not a multiple of 128*tile).
    x2 = jax.random.normal(k3, (2, 8, 20, 20), dtype=jnp.float32)
    t2 = jax.random.normal(k4, (2, 8, 20, 20), dtype=jnp.float32) * weight
    _, loss2 = content_loss_forward(x2, t2, weight, force_kernel=True)
    ref2 = jnp.mean((x2 * weight - t2) ** 2)
    jax.block_until_ready(loss2)
    assert jnp.allclose(loss2, ref2, rtol=1e-5, atol=1e-6), (loss2, ref2)

    print("KERNEL_OK")
</pallas_src>

<mosaic_0001>
module attributes {stable_mosaic.version = 11 : i64} {
  func.func @_mse_partial_kernel(%arg0: i32, %arg1: i32, %arg2: memref<1x1xf32, #tpu.memory_space<smem>>, %arg3: memref<8x128xf32, #tpu.memory_space<vmem>>, %arg4: memref<8x128xf32, #tpu.memory_space<vmem>>, %arg5: memref<8x128xf32, #tpu.memory_space<vmem>>, %arg6: memref<8x128xf32, #tpu.memory_space<vmem>>) attributes {dimension_semantics = [#tpu.dimension_semantics<parallel>, #tpu.dimension_semantics<arbitrary>], iteration_bounds = array<i64: 2, 1>, scalar_prefetch = 0 : i64, scratch_operands = 1 : i64, tpu.core_type = #tpu.core_type<tc>, window_params = [{transform_indices = @transform_0, window_bounds = array<i64: 1, 1>}, {transform_indices = @transform_1, window_bounds = array<i64: 8, 128>}, {transform_indices = @transform_2, window_bounds = array<i64: 8, 128>}, {transform_indices = @transform_3, window_bounds = array<i64: 8, 128>}]} {
    %c0_i32 = arith.constant 0 : i32
    %0 = arith.cmpi eq, %arg1, %c0_i32 : i32
    %1 = arith.extui %0 : i1 to i32
    %c0_i32_0 = arith.constant 0 : i32
    %2 = arith.cmpi ne, %1, %c0_i32_0 : i32
    scf.if %2 {
      %cst_12 = arith.constant 0.000000e+00 : f32
      %18 = vector.broadcast %cst_12 : f32 to vector<8x128xf32>
      %c0_13 = arith.constant 0 : index
      %c0_14 = arith.constant 0 : index
      %19 = vector.load %arg6[%c0_13, %c0_14] : memref<8x128xf32, #tpu.memory_space<vmem>>, vector<8x128xf32>
      tpu.vector_store %arg6[%c0_13, %c0_14], %18 {strides = array<i32>} : memref<8x128xf32, #tpu.memory_space<vmem>>, vector<8x128xf32>,
    } else {
    }
    %c0 = arith.constant 0 : index
    %c0_1 = arith.constant 0 : index
    %3 = memref.load %arg2[%c0, %c0_1] : memref<1x1xf32, #tpu.memory_space<smem>>
    %c0_2 = arith.constant 0 : index
    %c0_3 = arith.constant 0 : index
    %4 = vector.load %arg3[%c0_2, %c0_3] : memref<8x128xf32, #tpu.memory_space<vmem>>, vector<8x128xf32>
    %5 = vector.broadcast %3 : f32 to vector<8x128xf32>
    %6 = arith.mulf %4, %5 : vector<8x128xf32>
    %c0_4 = arith.constant 0 : index
    %c0_5 = arith.constant 0 : index
    %7 = vector.load %arg4[%c0_4, %c0_5] : memref<8x128xf32, #tpu.memory_space<vmem>>, vector<8x128xf32>
    %8 = arith.subf %6, %7 : vector<8x128xf32>
    %9 = arith.mulf %8, %8 : vector<8x128xf32>
    %c0_6 = arith.constant 0 : index
    %c0_7 = arith.constant 0 : index
    %10 = vector.load %arg6[%c0_6, %c0_7] : memref<8x128xf32, #tpu.memory_space<vmem>>, vector<8x128xf32>
    %11 = vector.shape_cast %9 : vector<8x128xf32> to vector<1x8x128xf32>
    %cst = arith.constant dense<0.000000e+00> : vector<8x128xf32>
    %12 = vector.multi_reduction <add>, %11, %cst [0] : vector<1x8x128xf32> to vector<8x128xf32>
    %13 = arith.addf %10, %12 : vector<8x128xf32>
    %c0_8 = arith.constant 0 : index
    %c0_9 = arith.constant 0 : index
    %14 = vector.load %arg6[%c0_8, %c0_9] : memref<8x128xf32, #tpu.memory_space<vmem>>, vector<8x128xf32>
    tpu.vector_store %arg6[%c0_8, %c0_9], %13 {strides = array<i32>} : memref<8x128xf32, #tpu.memory_space<vmem>>, vector<8x128xf32>,
    %c0_i32_10 = arith.constant 0 : i32
    %15 = arith.cmpi eq, %arg1, %c0_i32_10 : i32
    %16 = arith.extui %15 : i1 to i32
    %c0_i32_11 = arith.constant 0 : i32
    %17 = arith.cmpi ne, %16, %c0_i32_11 : i32
    scf.if %17 {
      %c0_12 = arith.constant 0 : index
      %c0_13 = arith.constant 0 : index
      %18 = vector.load %arg6[%c0_12, %c0_13] : memref<8x128xf32, #tpu.memory_space<vmem>>, vector<8x128xf32>
      %c0_14 = arith.constant 0 : index
      %c0_15 = arith.constant 0 : index
      %19 = vector.load %arg5[%c0_14, %c0_15] : memref<8x128xf32, #tpu.memory_space<vmem>>, vector<8x128xf32>
      tpu.vector_store %arg5[%c0_14, %c0_15], %18 {strides = array<i32>} : memref<8x128xf32, #tpu.memory_space<vmem>>, vector<8x128xf32>,
    } else {
    }
    return
  }
  func.func @transform_0(%arg0: i32, %arg1: i32) -> (i32, i32) {
    %c0_i32 = arith.constant 0 : i32
    %c0_i32_0 = arith.constant 0 : i32
    %c0_i32_1 = arith.constant 0 : i32
    return %c0_i32, %c0_i32_0 : i32, i32
  }
  func.func @transform_1(%arg0: i32, %arg1: i32) -> (i32, i32) {
    %c1_i32 = arith.constant 1 : i32
    %0 = arith.muli %arg0, %c1_i32 : i32
    %1 = arith.addi %0, %arg1 : i32
    %c0_i32 = arith.constant 0 : i32
    %c0_i32_0 = arith.constant 0 : i32
    return %1, %c0_i32 : i32, i32
  }
  func.func @transform_2(%arg0: i32, %arg1: i32) -> (i32, i32) {
    %c1_i32 = arith.constant 1 : i32
    %0 = arith.muli %arg0, %c1_i32 : i32
    %1 = arith.addi %0, %arg1 : i32
    %c0_i32 = arith.constant 0 : i32
    %c0_i32_0 = arith.constant 0 : i32
    return %1, %c0_i32 : i32, i32
  }
  func.func @transform_3(%arg0: i32, %arg1: i32) -> (i32, i32) {
    %c0_i32 = arith.constant 0 : i32
    %c0_i32_0 = arith.constant 0 : i32
    return %arg0, %c0_i32 : i32, i32
  }
}

</mosaic_0001>

<llo_original>
// kernel: tpu_custom_call.1
$region0: #{tpu_custom_call.1}
  #allocation0 [shape = 'u32[]', space=smem, size = 0x4, offset = 0x4, fixed_abs, tag = 'smem constant byte address 0x4 - core index']
  #allocation1 [shape = 'u32[144,128]{1,0:T(1,128)}', space=vmem, size = 0x12000, scoped, tag = 'internal scratch']
  #allocation2 [shape = 'f32[8,128]{1,0:T(8,128)}', space=vmem, size = 0x1000, scoped, tag = 'scratch operand']
  #allocation3 [shape = 'f32[1,1]{1,0:T(1,128)S(6)}', space=smem, size = 0x200, scoped, tag = 'scoped memory for tpu_custom_call.1']
  %s0 = inlined_call_operand.<no memory space> [shape: f32[1,1], index: 0, kind: input, shape index: {}]
  %s1 = inlined_call_operand.hbm [shape: f32[16,128], index: 1, kind: input, shape index: {}]
  %s2 = inlined_call_operand.hbm [shape: f32[16,128], index: 2, kind: input, shape index: {}]
  %s3 = inlined_call_operand.hbm [shape: f32[16,128], index: 3, kind: output, shape index: {}]
  %s4 = sld [smem:[#allocation0]]
  $region61: #{tpu_custom_call.1} parent=0
    _
  %s6 = ssub.s32 1, %s4
  %s7 = scalar_select 0, %s6, %s4
  %8 = sst [smem:[#allocation3]] %s0
  $region1: #{tpu_custom_call.1} parent=0
    #allocation4 [shape = 'u8[8192]{0}', space=vmem, size = 0x2000, scoped, tag = 'input window, operand 1']
    #allocation5 [shape = 's32[2]{0}', space=sflag, size = 0x8, scoped, tag = 'scoped memory for tpu_custom_call.1']
    #allocation6 [shape = 's32[2]{0}', space=sflag, size = 0x8, scoped, tag = 'scoped memory for tpu_custom_call.1']
    #allocation7 [shape = 'u8[8192]{0}', space=vmem, size = 0x2000, scoped, tag = 'input window, operand 2']
    #allocation8 [shape = 's32[2]{0}', space=sflag, size = 0x8, scoped, tag = 'scoped memory for tpu_custom_call.1']
    #allocation9 [shape = 'u8[8192]{0}', space=vmem, size = 0x2000, scoped, tag = 'output window, operand 0']
    %9 = vsyncpa [#allocation5], 0
    %s10 = scalar_lea.sflag [#allocation5], 1
    %11 = vsyncpa %s10, 0
    %12 = vsyncpa [#allocation8], 0
    %s13 = scalar_lea.sflag [#allocation8], 1
    %14 = vsyncpa %s13, 0
    %15 = vsyncpa [#allocation6], 0
    %s16 = scalar_lea.sflag [#allocation6], 1
    %17 = vsyncpa %s16, 0
    loop: start=0, step=1, limit=4
    $region2: #{tpu_custom_call.1} parent=1 // loop_pre_header
      _
    $region3: #{tpu_custom_call.1} parent=1 // loop_header
      %s19 = sphi 0, %s23
      %p20 = scmp.ge.s32.totalorder %s19, 4
      %s26 = sphi 0, %s38
      %s27 = sphi 0, %s34
      %s28 = sphi 0, %s26
      %s29 = sphi 0, %s27
      %s30 = sphi 0, %s28
      %s31 = sphi 0, %s29
      %s39 = sphi 0, %s39
      %s41 = sphi 0, %s39
      %s42 = sphi 0, %s41
      %s56 = sphi 0, %s42
      %s64 = sphi 0, %s66
      %s67 = sphi 0, %s64
      %s68 = sphi 0, %s67
      %s84 = sphi 0, %s68
      %s92 = sphi 0, %s94
      %s95 = sphi 0, %s92
      %s96 = sphi 0, %s95
      %s112 = sphi 0, %s96
      %s118 = sphi 0, %s120
      %s121 = sphi 0, %s118
      %s122 = sphi 0, %s121
      %s138 = sphi 0, %s122
    $region4: #{tpu_custom_call.1} parent=1 // loop_header_branch
      %22 = sbr.rel (%p20) target = $region8
    $region5: #{tpu_custom_call.1} parent=1 // loop_body
      %s24 = ssub.s32 %s19, 1
      %s25 = ssub.s32 %s19, 2
      %s32 = sadd.s32 1, %s27
      %p33 = scmp.ge.s32.totalorder %s32, 1
      %s34 = scalar_select %p33, 0, %s32
      %s35 = sadd.s32 1, %s26
      %s36 = scalar_select %p33, %s35, %s26
      %p37 = scmp.ge.s32.totalorder %s36, 2
      %s38 = scalar_select %p37, 0, %s36
      %s40 = sadd.s32 %s39, 1
      %p43 = scmp.eq.s32.totalorder %s19, 1
      %p44 = scmp.ne.s32.totalorder %s39, %s41
      %p45 = scmp.eq.s32.totalorder %s19, 0
      %p46 = por %p44, %p45
      %p47 = scmp.ne.s32.totalorder %s39, %s41
      %p48 = scmp.eq.s32.totalorder %s24, 1
      %p49 = por %p47, %p48
      %p50 = scmp.ne.s32.totalorder %s41, %s42
      %p51 = scmp.eq.s32.totalorder %s24, 0
      %p52 = por %p50, %p51
      %p53 = scmp.ne.s32.totalorder %s41, %s42
      %p54 = scmp.eq.s32.totalorder %s25, 1
      %p55 = por %p53, %p54
      %p57 = scmp.ne.s32.totalorder %s42, %s56
      %p58 = scmp.eq.s32.totalorder %s25, 0
      %p59 = por %p57, %p58
      %s60 = sadd.s32 %s26, %s27
      %s61 = sadd.s32 %s38, %s34
      %s62 = ssub.s32 %s60, %s61
      %p63 = scmp.eq.s32.totalorder %s62, 0
      %s65 = sadd.s32 %s64, 1
      %s66 = scalar_select %p63, %s64, %s65
      %p69 = pneg %p63
      %p70 = scmp.eq.s32.totalorder %s19, 1
      %p71 = por %p69, %p70
      %p72 = scmp.ne.s32.totalorder %s64, %s67
      %p73 = scmp.eq.s32.totalorder %s19, 0
      %p74 = por %p72, %p73
      %p75 = scmp.ne.s32.totalorder %s64, %s67
      %p76 = scmp.eq.s32.totalorder %s24, 1
      %p77 = por %p75, %p76
      %p78 = scmp.ne.s32.totalorder %s67, %s68
      %p79 = scmp.eq.s32.totalorder %s24, 0
      %p80 = por %p78, %p79
      %p81 = scmp.ne.s32.totalorder %s67, %s68
      %p82 = scmp.eq.s32.totalorder %s25, 1
      %p83 = por %p81, %p82
      %p85 = scmp.ne.s32.totalorder %s68, %s84
      %p86 = scmp.eq.s32.totalorder %s25, 0
      %p87 = por %p85, %p86
      %s88 = sadd.s32 %s26, %s27
      %s89 = sadd.s32 %s38, %s34
      %s90 = ssub.s32 %s88, %s89
      %p91 = scmp.eq.s32.totalorder %s90, 0
      %s93 = sadd.s32 %s92, 1
      %s94 = scalar_select %p91, %s92, %s93
      %p97 = pneg %p91
      %p98 = scmp.eq.s32.totalorder %s19, 1
      %p99 = por %p97, %p98
      %p100 = scmp.ne.s32.totalorder %s92, %s95
      %p101 = scmp.eq.s32.totalorder %s19, 0
      %p102 = por %p100, %p101
      %p103 = scmp.ne.s32.totalorder %s92, %s95
      %p104 = scmp.eq.s32.totalorder %s24, 1
      %p105 = por %p103, %p104
      %p106 = scmp.ne.s32.totalorder %s95, %s96
      %p107 = scmp.eq.s32.totalorder %s24, 0
      %p108 = por %p106, %p107
      %p109 = scmp.ne.s32.totalorder %s95, %s96
      %p110 = scmp.eq.s32.totalorder %s25, 1
      %p111 = por %p109, %p110
      %p113 = scmp.ne.s32.totalorder %s96, %s112
      %p114 = scmp.eq.s32.totalorder %s25, 0
      %p115 = por %p113, %p114
      %s116 = ssub.s32 %s26, %s38
      %p117 = scmp.eq.s32.totalorder %s116, 0
      %s119 = sadd.s32 %s118, 1
      %s120 = scalar_select %p117, %s118, %s119
      %p123 = pneg %p117
      %p124 = scmp.eq.s32.totalorder %s19, 1
      %p125 = por %p123, %p124
      %p126 = scmp.ne.s32.totalorder %s118, %s121
      %p127 = scmp.eq.s32.totalorder %s19, 0
      %p128 = por %p126, %p127
      %p129 = scmp.ne.s32.totalorder %s118, %s121
      %p130 = scmp.eq.s32.totalorder %s24, 1
      %p131 = por %p129, %p130
      %p132 = scmp.ne.s32.totalorder %s121, %s122
      %p133 = scmp.eq.s32.totalorder %s24, 0
      %p134 = por %p132, %p133
      %p135 = scmp.ne.s32.totalorder %s121, %s122
      %p136 = scmp.eq.s32.totalorder %s25, 1
      %p137 = por %p135, %p136
      %p139 = scmp.ne.s32.totalorder %s122, %s138
      %p140 = scmp.eq.s32.totalorder %s25, 0
      %p141 = por %p139, %p140
      %p142 = scmp.le.s32.totalorder 1, %s19
      %p143 = scmp.lt.s32.totalorder %s19, 3
      %p144 = pnand %p142, %p143
      %p145 = pneg %p144
      // Predicated region
      $region9: #{tpu_custom_call.1} parent=5 // pred_check
        _
      $region10: #{tpu_custom_call.1} parent=5 // pred_check_branch
        %147 = sbr.rel (%p144) target = $region12
      $region11: #{tpu_custom_call.1} parent=5 // pred_region
        %s148 = ssub.s32 %s19, 1
        // Predicated region
        $region13: #{tpu_custom_call.1} parent=11 // pred_check
          %p149 = pneg %p52
        $region14: #{tpu_custom_call.1} parent=11 // pred_check_branch
          %151 = sbr.rel (%p149) target = $region16
        $region15: #{tpu_custom_call.1} parent=11 // pred_region
          _
        $region16: #{tpu_custom_call.1} parent=11 // pred_fallthru
          _
      $region12: #{tpu_custom_call.1} parent=5 // pred_fallthru
        _
      %p152 = scmp.lt.s32.totalorder %s19, 2
      // Predicated region
      $region17: #{tpu_custom_call.1} parent=5 // pred_check
        %p153 = pneg %p152
      $region18: #{tpu_custom_call.1} parent=5 // pred_check_branch
        %155 = sbr.rel (%p153) target = $region20
      $region19: #{tpu_custom_call.1} parent=5 // pred_region
        // Predicated region
        $region21: #{tpu_custom_call.1} parent=19 // pred_check
          %p156 = pneg %p74
        $region22: #{tpu_custom_call.1} parent=19 // pred_check_branch
          %158 = sbr.rel (%p156) target = $region24
        $region23: #{tpu_custom_call.1} parent=19 // pred_region
          %s159 = sand.u32 %s64, 1
          %s160 = scalar_lea.sflag [#allocation5], %s159
          %s161 = sand.u32 %s64, 1
          %s162 = smul.addr %s161, 8
          %s163 = scalar_lea.vmem [#allocation4], %s162
          %s164 = sadd.s32 %s26, %s27
          %s166 = ssub.s32 128, 128
          %167 = vsyncadd %s160, %s166
          %s168 = smul.addr %s164, 128
          %s169 = scalar_lea.hbm %s1, %s168
          %s171 = sshll.u32 %s163, 4
          %s172 = int_to_ptr.vmem [resolvable:$true] %s171
          %174 = dma.hbm_to_vmem [thread:$0]  %s169, 128, %s172, %s160
        $region24: #{tpu_custom_call.1} parent=19 // pred_fallthru
          _
        // Predicated region
        $region25: #{tpu_custom_call.1} parent=19 // pred_check
          %p175 = pneg %p102
        $region26: #{tpu_custom_call.1} parent=19 // pred_check_branch
          %177 = sbr.rel (%p175) target = $region28
        $region27: #{tpu_custom_call.1} parent=19 // pred_region
          %s178 = sand.u32 %s92, 1
          %s179 = scalar_lea.sflag [#allocation8], %s178
          %s180 = sand.u32 %s92, 1
          %s181 = smul.addr %s180, 8
          %s182 = scalar_lea.vmem [#allocation7], %s181
          %s183 = sadd.s32 %s26, %s27
          %s185 = ssub.s32 128, 128
          %186 = vsyncadd %s179, %s185
          %s187 = smul.addr %s183, 128
          %s188 = scalar_lea.hbm %s2, %s187
          %s190 = sshll.u32 %s182, 4
          %s191 = int_to_ptr.vmem [resolvable:$true] %s190
          %193 = dma.hbm_to_vmem [thread:$0]  %s188, 128, %s191, %s179
        $region28: #{tpu_custom_call.1} parent=19 // pred_fallthru
          _
      $region20: #{tpu_custom_call.1} parent=5 // pred_fallthru
        _
      %p194 = scmp.le.s32.totalorder 1, %s19
      %p195 = scmp.lt.s32.totalorder %s19, 3
      %p196 = pnand %p194, %p195
      %p197 = pneg %p196
      // Predicated region
      $region29: #{tpu_custom_call.1} parent=5 // pred_check
        _
      $region30: #{tpu_custom_call.1} parent=5 // pred_check_branch
        %199 = sbr.rel (%p196) target = $region32
      $region31: #{tpu_custom_call.1} parent=5 // pred_region
        %s200 = ssub.s32 %s19, 1
        %s201 = sand.u32 %s67, 1
        %s202 = scalar_lea.sflag [#allocation5], %s201
        %s203 = sand.u32 %s67, 1
        %s204 = smul.addr %s203, 8
        %s205 = scalar_lea.vmem [#allocation4], %s204
        // Predicated region
        $region33: #{tpu_custom_call.1} parent=31 // pred_check
          %p206 = pneg %p80
        $region34: #{tpu_custom_call.1} parent=31 // pred_check_branch
          %208 = sbr.rel (%p206) target = $region36
        $region35: #{tpu_custom_call.1} parent=31 // pred_region
          %209 = dma.done %s202, 128
        $region36: #{tpu_custom_call.1} parent=31 // pred_fallthru
          _
        %s210 = sand.u32 %s95, 1
        %s211 = scalar_lea.sflag [#allocation8], %s210
        %s212 = sand.u32 %s95, 1
        %s213 = smul.addr %s212, 8
        %s214 = scalar_lea.vmem [#allocation7], %s213
        // Predicated region
        $region37: #{tpu_custom_call.1} parent=31 // pred_check
          %p215 = pneg %p108
        $region38: #{tpu_custom_call.1} parent=31 // pred_check_branch
          %217 = sbr.rel (%p215) target = $region40
        $region39: #{tpu_custom_call.1} parent=31 // pred_region
          %218 = dma.done %s211, 128
        $region40: #{tpu_custom_call.1} parent=31 // pred_fallthru
          _
        %p219 = pneg %p52
        %p220 = pneg %p49
        %s221 = sand.u32 %s67, 1
        %s222 = scalar_lea.sflag [#allocation5], %s221
        %s223 = sand.u32 %s67, 1
        %s224 = smul.addr %s223, 8
        %s225 = scalar_lea.vmem [#allocation4], %s224
        %p226 = pneg %p80
        %p227 = pneg %p77
        %s228 = sand.u32 %s95, 1
        %s229 = scalar_lea.sflag [#allocation8], %s228
        %s230 = sand.u32 %s95, 1
        %s231 = smul.addr %s230, 8
        %s232 = scalar_lea.vmem [#allocation7], %s231
        %p233 = pneg %p108
        %p234 = pneg %p105
        %p235 = pneg %p134
        %p236 = pneg %p131
        %s237 = sand.u32 %s121, 1
        %s238 = scalar_lea.sflag [#allocation6], %s237
        %s239 = sand.u32 %s121, 1
        %s240 = smul.addr %s239, 8
        %s241 = scalar_lea.vmem [#allocation9], %s240
        %s242 = sadd.s32 %s28, %s29
        %s243 = sadd.s32 %s28, %s29
        %p244 = scmp.eq.s32.totalorder %s29, 0
        // Predicated region
        $region41: #{tpu_custom_call.1} parent=31 // pred_check
          %p245 = pneg %p244
        $region42: #{tpu_custom_call.1} parent=31 // pred_check_branch
          %247 = sbr.rel (%p245) target = $region44
        $region43: #{tpu_custom_call.1} parent=31 // pred_region
          %248 = vst [vmem:[#allocation2] sm:$0xff] 0.0
        $region44: #{tpu_custom_call.1} parent=31 // pred_fallthru
          _
        %s249 = sld [smem:[#allocation3]]
        %v250 = vld [vmem:[%s205] sm:$0xff]
        %v251 = vstv %s249
        %v252 = vmul.f32 %v250, %v251
        %v253 = vld [vmem:[%s214] sm:$0xff]
        %v254 = vsub.f32 %v252, %v253
        %v255 = vmul.f32 %v254, %v254
        %v256 = vld [vmem:[#allocation2] sm:$0xff]
        %v257 = vadd.f32 %v255, 0.0
        %v258 = vadd.f32 %v256, %v257
        %259 = vst [vmem:[#allocation2] sm:$0xff] %v258
        // Predicated region
        $region45: #{tpu_custom_call.1} parent=31 // pred_check
          %p260 = pneg %p244
        $region46: #{tpu_custom_call.1} parent=31 // pred_check_branch
          %262 = sbr.rel (%p260) target = $region48
        $region47: #{tpu_custom_call.1} parent=31 // pred_region
          %v263 = vld [vmem:[#allocation2] sm:$0xff]
          %264 = vst [vmem:[%s241] sm:$0xff] %v263
        $region48: #{tpu_custom_call.1} parent=31 // pred_fallthru
          _
        %s265 = sand.u32 %s121, 1
        %s266 = scalar_lea.sflag [#allocation6], %s265
        %s267 = sand.u32 %s121, 1
        %s268 = smul.addr %s267, 8
        %s269 = scalar_lea.vmem [#allocation9], %s268
        // Predicated region
        $region49: #{tpu_custom_call.1} parent=31 // pred_check
          %p270 = pneg %p131
        $region50: #{tpu_custom_call.1} parent=31 // pred_check_branch
          %272 = sbr.rel (%p270) target = $region52
        $region51: #{tpu_custom_call.1} parent=31 // pred_region
          %s274 = ssub.s32 128, 128
          %275 = vsyncadd %s266, %s274
          %s276 = smul.addr %s28, 128
          %s277 = scalar_lea.hbm %s3, %s276
          %s279 = sshll.u32 %s269, 4
          %s280 = int_to_ptr.vmem [resolvable:$true] %s279
          %282 = dma.vmem_to_hbm [thread:$0]  %s280, 128, %s277, %s266
        $region52: #{tpu_custom_call.1} parent=31 // pred_fallthru
          _
      $region32: #{tpu_custom_call.1} parent=5 // pred_fallthru
        _
      %p283 = scmp.le.s32.totalorder 2, %s19
      // Predicated region
      $region53: #{tpu_custom_call.1} parent=5 // pred_check
        %p284 = pneg %p283
      $region54: #{tpu_custom_call.1} parent=5 // pred_check_branch
        %286 = sbr.rel (%p284) target = $region56
      $region55: #{tpu_custom_call.1} parent=5 // pred_region
        %s287 = ssub.s32 %s19, 2
        // Predicated region
        $region57: #{tpu_custom_call.1} parent=55 // pred_check
          %p288 = pneg %p137
        $region58: #{tpu_custom_call.1} parent=55 // pred_check_branch
          %290 = sbr.rel (%p288) target = $region60
        $region59: #{tpu_custom_call.1} parent=55 // pred_region
          %s291 = sand.u32 %s122, 1
          %s292 = scalar_lea.sflag [#allocation6], %s291
          %s293 = sand.u32 %s122, 1
          %s294 = smul.addr %s293, 8
          %s295 = scalar_lea.vmem [#allocation9], %s294
          %296 = dma.done %s292, 128
        $region60: #{tpu_custom_call.1} parent=55 // pred_fallthru
          _
      $region56: #{tpu_custom_call.1} parent=5 // pred_fallthru
        _
    $region6: #{tpu_custom_call.1} parent=1 // loop_footer
      %s23 = sadd.s32 1, %s19
    $region7: #{tpu_custom_call.1} parent=1 // loop_footer_branch
      %18 = sbr.rel target = $region3
    $region8: #{tpu_custom_call.1} parent=1 // loop_exit
      _
    %297 = vsyncpa [#allocation5], 1
    %s298 = scalar_lea.sflag [#allocation5], 1
    %299 = vsyncpa %s298, 1
    %300 = vsyncpa [#allocation8], 1
    %s301 = scalar_lea.sflag [#allocation8], 1
    %302 = vsyncpa %s301, 1
    %303 = vsyncpa [#allocation6], 1
    %s304 = scalar_lea.sflag [#allocation6], 1
    %305 = vsyncpa %s304, 1

</llo_original>
